<compile_context>
chip_gen: v5e
topology: v5e:2x2
jax: 0.10.0
libtpu: 0.0.40
codegen_flags: <defaults>
</compile_context>

<pallas_src>
import functools

import jax
import jax.numpy as jnp
from jax.experimental import pallas as pl
from jax.experimental.pallas import tpu as pltpu


def _round_up(x, m):
    return ((x + m - 1) // m) * m


# ----------------------------- Pallas kernel --------------------------------
def _pca_transform_kernel(x_ref, comp_t_ref, off_ref, o_ref, acc_ref):
    # Grid: (row tiles, K/feature tiles); K is a reduction axis.
    # x_ref:      (TM, TK)       tile of input rows
    # comp_t_ref: (TK, d_pad)    K-slab of components_.T, lane-dense padded
    # off_ref:    (1, d_pad)     precomputed -(mean_ @ comp_t_pad), f32
    # o_ref:      (TM, d_pad)    projected output tile (lane-dense)
    # acc_ref:    (TM, d_pad)    f32 accumulator scratch
    k = pl.program_id(1)

    @pl.when(k == 0)
    def _():
        acc_ref[...] = jnp.zeros_like(acc_ref)

    acc_ref[...] += jnp.dot(
        x_ref[...], comp_t_ref[...], preferred_element_type=jnp.float32
    )

    @pl.when(k == pl.num_programs(1) - 1)
    def _():
        o_ref[...] = (acc_ref[...] + off_ref[...]).astype(o_ref.dtype)


@functools.partial(
    jax.jit, static_argnames=("tm", "tk", "out_dtype", "vmem_limit_bytes")
)
def _pca_project_pallas(x, comp_t_pad, offset_pad, *, tm, tk, out_dtype,
                        vmem_limit_bytes):
    n, dfeat = x.shape
    d_pad = comp_t_pad.shape[1]
    nk = pl.cdiv(dfeat, tk)
    grid = (pl.cdiv(n, tm), nk)

    # Constant-index operands get a single buffer (no point double-buffering).
    comp_pipeline = pl.Buffered(1) if nk == 1 else None  # default (2) when K-tiled

    itemsize = x.dtype.itemsize
    out_itemsize = jnp.dtype(out_dtype).itemsize
    cost = pl.CostEstimate(
        flops=2 * n * dfeat * d_pad,
        transcendentals=0,
        bytes_accessed=itemsize * (n * dfeat + dfeat * d_pad)
        + out_itemsize * n * d_pad,
    )

    return pl.pallas_call(
        _pca_transform_kernel,
        out_shape=jax.ShapeDtypeStruct((n, d_pad), out_dtype),
        grid_spec=pltpu.PrefetchScalarGridSpec(
            num_scalar_prefetch=0,
            grid=grid,
            in_specs=[
                pl.BlockSpec((tm, tk), lambda i, k: (i, k)),             # X tile
                pl.BlockSpec((tk, d_pad), lambda i, k: (k, 0),
                             pipeline_mode=comp_pipeline),               # comp_t slab
                pl.BlockSpec((1, d_pad), lambda i, k: (0, 0),
                             pipeline_mode=pl.Buffered(1)),              # offset row
            ],
            out_specs=pl.BlockSpec((tm, d_pad), lambda i, k: (i, 0)),
            scratch_shapes=[pltpu.VMEM((tm, d_pad), jnp.float32)],
        ),
        compiler_params=pltpu.CompilerParams(
            dimension_semantics=("parallel", "arbitrary"),
            vmem_limit_bytes=vmem_limit_bytes,
        ),
        cost_estimate=cost,
    )(x, comp_t_pad, offset_pad)


# ----------------------------- wrapper ---------------------------------------
def _prepare_projection(mean_, components_, compute_dtype):
    """Lane-dense padded components^T plus the folded-mean f32 offset."""
    d, _ = components_.shape
    d_pad = _round_up(max(d, 1), 128)
    comp_t = components_.T.astype(compute_dtype)                 # (D, d)
    comp_t_pad = jnp.pad(comp_t, ((0, 0), (0, d_pad - d)))       # (D, d_pad)
    # Offset kept in f32 (added to the f32 accumulator) regardless of compute dtype.
    offset_pad = -(mean_.astype(jnp.float32)
                   @ comp_t_pad.astype(jnp.float32))             # (1, d_pad)
    return comp_t_pad, offset_pad


def pca_transform_pallas(x, mean_, components_, *, comp_t_pad=None,
                         offset_pad=None, compute_dtype=None):
    """(x - mean_) @ components_.T  via a Pallas TPU streaming matmul kernel."""
    n, dfeat = x.shape
    d = components_.shape[0]
    out_dtype = jnp.dtype(x.dtype)
    compute_dtype = jnp.dtype(compute_dtype) if compute_dtype is not None else out_dtype

    if (comp_t_pad is None or offset_pad is None
            or jnp.dtype(comp_t_pad.dtype) != compute_dtype):
        comp_t_pad, offset_pad = _prepare_projection(mean_, components_, compute_dtype)
    d_pad = comp_t_pad.shape[1]

    if jnp.dtype(x.dtype) != compute_dtype:
        x = x.astype(compute_dtype)

    # ---- generation-aware VMEM budget (v5e/v6e: 128 MiB, v7x: 64 MiB) ----
    try:
        vmem_cap = int(pltpu.get_tpu_info().vmem_capacity_bytes)
    except Exception:  # pragma: no cover - conservative fallback
        vmem_cap = 64 * 1024 * 1024
    vmem_budget = (vmem_cap * 3) // 4  # headroom for compiler scratch

    itemsize = compute_dtype.itemsize
    out_itemsize = out_dtype.itemsize

    # ---- K (feature) tiling: bound the resident components slab ----
    comp_bytes = dfeat * d_pad * itemsize
    comp_budget = min(12 * 1024 * 1024, vmem_budget // 4)
    if comp_bytes <= comp_budget:
        tk = dfeat          # fully resident, single-buffered (Buffered(1))
        nk = 1
    else:
        tk = 512
        dfeat_pad = _round_up(dfeat, tk)
        if dfeat_pad != dfeat:
            # Zero-pad the reduction axis so partial K tiles stay exact.
            x = jnp.pad(x, ((0, 0), (0, dfeat_pad - dfeat)))
            comp_t_pad = jnp.pad(comp_t_pad, ((0, dfeat_pad - dfeat), (0, 0)))
            dfeat = dfeat_pad
        nk = dfeat // tk

    # ---- row tile: big enough to amortize ~0.35us/step overhead, bounded by
    #      VMEM, and capped so the parallel row axis keeps >= 4 grid steps
    #      when N allows (dual-TC sharding on v7x) ----
    comp_resident = comp_bytes if nk == 1 else 2 * tk * d_pad * itemsize
    fixed_bytes = comp_resident + d_pad * 4                      # comp slab + offset
    per_row = 2 * tk * itemsize + 2 * d_pad * out_itemsize + d_pad * 4
    tm_vmem_cap = max(8, ((vmem_budget - fixed_bytes) // max(per_row, 1)) // 8 * 8)
    tm_target = 2048
    tm_grid_cap = max(8, _round_up(-(-n // 4), 8))
    tm = int(max(8, min(tm_target, tm_vmem_cap, tm_grid_cap)))

    vmem_needed = fixed_bytes + tm * per_row
    vmem_limit = int(min(vmem_cap - 2 * 1024 * 1024,
                         max(vmem_needed + 4 * 1024 * 1024, 32 * 1024 * 1024)))

    y_pad = _pca_project_pallas(
        x, comp_t_pad, offset_pad,
        tm=tm, tk=tk, out_dtype=out_dtype, vmem_limit_bytes=vmem_limit)

    if d_pad == d:
        return y_pad
    # Semantics of transform() require (N, d); callers that can consume the
    # lane-dense padded result should use the padded array directly.
    return y_pad[:, :d]


# ----------------------------- PCA module (JAX) ------------------------------
def svd_flip(u, v):
    """Sign-flip singular vectors for deterministic output (matches torch ref)."""
    max_abs_cols = jnp.argmax(jnp.abs(u), axis=0)
    i = jnp.arange(u.shape[1])
    signs = jnp.sign(u[max_abs_cols, i])
    signs = jnp.where(signs == 0, jnp.ones_like(signs), signs)  # guard exact zeros
    u = u * signs
    v = v * signs[:, None]
    return u, v


class PCA:
    def __init__(self, n_components, compute_dtype=None):
        self.n_components = n_components
        # Optional lower-precision input path (e.g. jnp.bfloat16) for the
        # bandwidth-bound X stream; accumulation/offset stay f32 in-kernel.
        self.compute_dtype = compute_dtype
        self.mean_ = None
        self.components_ = None
        self._comp_t_pad = None
        self._offset_pad = None

    def fit(self, X):
        n, dfeat = X.shape
        d = dfeat if self.n_components is None else min(self.n_components, dfeat)
        self.mean_ = jnp.mean(X, axis=0, keepdims=True)          # (1, D)
        Z = X - self.mean_
        U, S, Vh = jnp.linalg.svd(Z, full_matrices=False)
        U, Vt = svd_flip(U, Vh)
        self.components_ = Vt[:d]                                 # (d, D)
        # Cache padded components / folded-mean offset for transform().
        cd = (jnp.dtype(self.compute_dtype) if self.compute_dtype is not None
              else jnp.dtype(X.dtype))
        self._comp_t_pad, self._offset_pad = _prepare_projection(
            self.mean_, self.components_, cd)
        return self

    def forward(self, X):
        return self.transform(X)

    def transform(self, X):
        assert self.components_ is not None, "PCA must be fit before use."
        return pca_transform_pallas(
            X, self.mean_, self.components_,
            comp_t_pad=self._comp_t_pad, offset_pad=self._offset_pad,
            compute_dtype=self.compute_dtype)

    def fit_transform(self, X):
        self.fit(X)
        return self.transform(X)

    def inverse_transform(self, Y):
        assert self.components_ is not None, "PCA must be fit before use."
        return jnp.matmul(Y, self.components_) + self.mean_


# --------------------------------- main --------------------------------------
if __name__ == "__main__":
    key = jax.random.PRNGKey(0)

    # Small shapes consistent with the module: 8 samples, 32 features, 4 comps.
    N, D, NC = 8, 32, 4
    X = jax.random.normal(key, (N, D), dtype=jnp.float32)

    pca = PCA(n_components=NC).fit(X)
    Y = pca.forward(X)                        # Pallas kernel path
    Y = jax.block_until_ready(Y)

    Y_ref = jnp.matmul(X - pca.mean_, pca.components_.T)
    assert Y.shape == (N, NC)
    assert jnp.allclose(Y, Y_ref, atol=1e-4, rtol=1e-4), "mismatch vs reference (small)"

    # Second case: partial row tiles, multi-step row grid, column pad/slice.
    key2 = jax.random.PRNGKey(1)
    N2, D2, NC2 = 300, 160, 5
    X2 = jax.random.normal(key2, (N2, D2), dtype=jnp.float32)
    pca2 = PCA(n_components=NC2).fit(X2)
    Y2 = jax.block_until_ready(pca2.forward(X2))
    Y2_ref = jnp.matmul(X2 - pca2.mean_, pca2.components_.T)
    assert Y2.shape == (N2, NC2)
    assert jnp.allclose(Y2, Y2_ref, atol=1e-3, rtol=1e-3), "mismatch vs reference (large)"

    print("KERNEL_OK")
</pallas_src>

<mosaic_0001>
module attributes {stable_mosaic.version = 11 : i64} {
  func.func @_pca_transform_kernel(%arg0: i32, %arg1: i32, %arg2: memref<8x32xf32, #tpu.memory_space<vmem>>, %arg3: memref<32x128xf32, #tpu.memory_space<vmem>>, %arg4: memref<1x128xf32, #tpu.memory_space<vmem>>, %arg5: memref<8x128xf32, #tpu.memory_space<vmem>>, %arg6: memref<8x128xf32, #tpu.memory_space<vmem>>) attributes {dimension_semantics = [#tpu.dimension_semantics<parallel>, #tpu.dimension_semantics<arbitrary>], iteration_bounds = array<i64: 1, 1>, scalar_prefetch = 0 : i64, scratch_operands = 1 : i64, tpu.core_type = #tpu.core_type<tc>, window_params = [{transform_indices = @transform_0, window_bounds = array<i64: 8, 32>}, {pipeline_mode = #tpu.pipeline_mode<synchronous>, transform_indices = @transform_1, window_bounds = array<i64: 32, 128>}, {pipeline_mode = #tpu.pipeline_mode<synchronous>, transform_indices = @transform_2, window_bounds = array<i64: 1, 128>}, {transform_indices = @transform_3, window_bounds = array<i64: 8, 128>}]} {
    %c0_i32 = arith.constant 0 : i32
    %0 = arith.cmpi eq, %arg1, %c0_i32 : i32
    %1 = arith.extui %0 : i1 to i32
    %c0_i32_0 = arith.constant 0 : i32
    %2 = arith.cmpi ne, %1, %c0_i32_0 : i32
    scf.if %2 {
      %cst_10 = arith.constant 0.000000e+00 : f32
      %12 = vector.broadcast %cst_10 : f32 to vector<8x128xf32>
      %c0_11 = arith.constant 0 : index
      %c0_12 = arith.constant 0 : index
      %13 = vector.load %arg6[%c0_11, %c0_12] : memref<8x128xf32, #tpu.memory_space<vmem>>, vector<8x128xf32>
      tpu.vector_store %arg6[%c0_11, %c0_12], %12 {strides = array<i32>} : memref<8x128xf32, #tpu.memory_space<vmem>>, vector<8x128xf32>,
    } else {
    }
    %c0 = arith.constant 0 : index
    %c0_1 = arith.constant 0 : index
    %3 = vector.load %arg6[%c0, %c0_1] : memref<8x128xf32, #tpu.memory_space<vmem>>, vector<8x128xf32>
    %c0_2 = arith.constant 0 : index
    %c0_3 = arith.constant 0 : index
    %4 = vector.load %arg2[%c0_2, %c0_3] : memref<8x32xf32, #tpu.memory_space<vmem>>, vector<8x32xf32>
    %c0_4 = arith.constant 0 : index
    %c0_5 = arith.constant 0 : index
    %5 = vector.load %arg3[%c0_4, %c0_5] : memref<32x128xf32, #tpu.memory_space<vmem>>, vector<32x128xf32>
    %cst = arith.constant dense<0.000000e+00> : vector<8x128xf32>
    %6 = tpu.matmul %4, %5, %cst {dimension_numbers = #tpu.dot_dimension_numbers<[1], [0], [0], [1], [0, 0, 1, 1], [], []>} : vector<8x32xf32>, vector<32x128xf32>, vector<8x128xf32> -> vector<8x128xf32>
    %7 = arith.addf %3, %6 : vector<8x128xf32>
    %c0_6 = arith.constant 0 : index
    %c0_7 = arith.constant 0 : index
    %8 = vector.load %arg6[%c0_6, %c0_7] : memref<8x128xf32, #tpu.memory_space<vmem>>, vector<8x128xf32>
    tpu.vector_store %arg6[%c0_6, %c0_7], %7 {strides = array<i32>} : memref<8x128xf32, #tpu.memory_space<vmem>>, vector<8x128xf32>,
    %c0_i32_8 = arith.constant 0 : i32
    %9 = arith.cmpi eq, %arg1, %c0_i32_8 : i32
    %10 = arith.extui %9 : i1 to i32
    %c0_i32_9 = arith.constant 0 : i32
    %11 = arith.cmpi ne, %10, %c0_i32_9 : i32
    scf.if %11 {
      %c0_10 = arith.constant 0 : index
      %c0_11 = arith.constant 0 : index
      %12 = vector.load %arg6[%c0_10, %c0_11] : memref<8x128xf32, #tpu.memory_space<vmem>>, vector<8x128xf32>
      %c0_12 = arith.constant 0 : index
      %c0_13 = arith.constant 0 : index
      %13 = vector.load %arg4[%c0_12, %c0_13] : memref<1x128xf32, #tpu.memory_space<vmem>>, vector<1x128xf32>
      %14 = vector.broadcast %13 : vector<1x128xf32> to vector<8x128xf32>
      %15 = arith.addf %12, %14 : vector<8x128xf32>
      %c0_14 = arith.constant 0 : index
      %c0_15 = arith.constant 0 : index
      %16 = vector.load %arg5[%c0_14, %c0_15] : memref<8x128xf32, #tpu.memory_space<vmem>>, vector<8x128xf32>
      tpu.vector_store %arg5[%c0_14, %c0_15], %15 {strides = array<i32>} : memref<8x128xf32, #tpu.memory_space<vmem>>, vector<8x128xf32>,
    } else {
    }
    return
  }
  func.func @transform_0(%arg0: i32, %arg1: i32) -> (i32, i32) {
    %c0_i32 = arith.constant 0 : i32
    return %arg0, %arg1 : i32, i32
  }
  func.func @transform_1(%arg0: i32, %arg1: i32) -> (i32, i32) {
    %c0_i32 = arith.constant 0 : i32
    %c0_i32_0 = arith.constant 0 : i32
    return %arg1, %c0_i32 : i32, i32
  }
  func.func @transform_2(%arg0: i32, %arg1: i32) -> (i32, i32) {
    %c0_i32 = arith.constant 0 : i32
    %c0_i32_0 = arith.constant 0 : i32
    %c0_i32_1 = arith.constant 0 : i32
    return %c0_i32, %c0_i32_0 : i32, i32
  }
  func.func @transform_3(%arg0: i32, %arg1: i32) -> (i32, i32) {
    %c0_i32 = arith.constant 0 : i32
    %c0_i32_0 = arith.constant 0 : i32
    return %arg0, %c0_i32 : i32, i32
  }
}

</mosaic_0001>

<llo_original>
// kernel: _pca_project_pallas.1
$region0: #{_pca_project_pallas.1}
  #allocation0 [shape = 'u32[]', space=smem, size = 0x4, offset = 0x4, fixed_abs, tag = 'smem constant byte address 0x4 - core index']
  #allocation1 [shape = 'u32[72,128]{1,0:T(1,128)}', space=vmem, size = 0x9000, scoped, tag = 'internal scratch']
  #allocation2 [shape = 'f32[8,128]{1,0:T(8,128)}', space=vmem, size = 0x1000, scoped, tag = 'scratch operand']
  %s0 = inlined_call_operand.hbm [shape: f32[8,32], index: 0, kind: input, shape index: {}]
  %s1 = inlined_call_operand.hbm [shape: f32[32,128], index: 1, kind: input, shape index: {}]
  %s2 = inlined_call_operand.vmem [shape: f32[1,128], index: 2, kind: input, shape index: {}]
  %s3 = inlined_call_operand.hbm [shape: f32[8,128], index: 3, kind: output, shape index: {}]
  %s4 = sld [smem:[#allocation0]]
  $region38: #{_pca_project_pallas.1} parent=0
    _
  %s6 = ssub.s32 1, %s4
  %s7 = scalar_select 0, %s6, %s4
  $region1: #{_pca_project_pallas.1} parent=0
    #allocation3 [shape = 'u8[4096]{0}', space=vmem, size = 0x1000, scoped, tag = 'input window, operand 0, single buffered']
    #allocation4 [shape = 's32[1]{0}', space=sflag, size = 0x4, scoped, tag = 'scoped memory for _pca_project_pallas.1']
    #allocation5 [shape = 's32[1]{0}', space=sflag, size = 0x4, scoped, tag = 'scoped memory for _pca_project_pallas.1']
    #allocation6 [shape = 'u8[16384]{0}', space=vmem, size = 0x4000, scoped, tag = 'input window, operand 1, single buffered']
    #allocation7 [shape = 's32[1]{0}', space=sflag, size = 0x4, scoped, tag = 'scoped memory for _pca_project_pallas.1']
    #allocation8 [shape = 'u8[4096]{0}', space=vmem, size = 0x1000, scoped, tag = 'output window, operand 0, single buffered']
    %8 = vsyncpa [#allocation4], 0
    %9 = vsyncpa [#allocation7], 0
    %10 = vsyncpa [#allocation5], 0
    // Predicated region
    $region2: #{_pca_project_pallas.1} parent=1 // pred_check
      _
    $region3: #{_pca_project_pallas.1} parent=1 // pred_check_branch
      %12 = sbr.rel (0) target = $region5
    $region4: #{_pca_project_pallas.1} parent=1 // pred_region
      %14 = vsyncadd [#allocation4], 0
      %s16 = sshll.u32 %s0, 4
      %s17 = int_to_ptr.hbm [resolvable:$true] %s16
      %s18 = sshll.u32 [#allocation3], 4
      %s19 = int_to_ptr.vmem [resolvable:$true] %s18
      %21 = dma.hbm_to_vmem [thread:$0]  %s17, 128, %s19, [#allocation4]
    $region5: #{_pca_project_pallas.1} parent=1 // pred_fallthru
      _
    // Predicated region
    $region6: #{_pca_project_pallas.1} parent=1 // pred_check
      _
    $region7: #{_pca_project_pallas.1} parent=1 // pred_check_branch
      %23 = sbr.rel (0) target = $region9
    $region8: #{_pca_project_pallas.1} parent=1 // pred_region
      %25 = vsyncadd [#allocation7], 0
      %s26 = sshll.u32 %s1, 4
      %s27 = int_to_ptr.hbm [resolvable:$true] %s26
      %s28 = sshll.u32 [#allocation6], 4
      %s29 = int_to_ptr.vmem [resolvable:$true] %s28
      %34 = dma.hbm_to_vmem [thread:$0]  %s27, 512, %s29, [#allocation7], 128, 128, 8
    $region9: #{_pca_project_pallas.1} parent=1 // pred_fallthru
      _
    // Predicated region
    $region10: #{_pca_project_pallas.1} parent=1 // pred_check
      _
    $region11: #{_pca_project_pallas.1} parent=1 // pred_check_branch
      %36 = sbr.rel (0) target = $region13
    $region12: #{_pca_project_pallas.1} parent=1 // pred_region
      _
    $region13: #{_pca_project_pallas.1} parent=1 // pred_fallthru
      _
    // Predicated region
    $region14: #{_pca_project_pallas.1} parent=1 // pred_check
      _
    $region15: #{_pca_project_pallas.1} parent=1 // pred_check_branch
      %38 = sbr.rel (0) target = $region17
    $region16: #{_pca_project_pallas.1} parent=1 // pred_region
      %40 = dma.done [#allocation4], 128
    $region17: #{_pca_project_pallas.1} parent=1 // pred_fallthru
      _
    // Predicated region
    $region18: #{_pca_project_pallas.1} parent=1 // pred_check
      _
    $region19: #{_pca_project_pallas.1} parent=1 // pred_check_branch
      %42 = sbr.rel (0) target = $region21
    $region20: #{_pca_project_pallas.1} parent=1 // pred_region
      %44 = dma.done [#allocation7], 512
    $region21: #{_pca_project_pallas.1} parent=1 // pred_fallthru
      _
    %p45 = scmp.eq.s32.totalorder 0, 0
    // Predicated region
    $region22: #{_pca_project_pallas.1} parent=1 // pred_check
      %p46 = pneg %p45
    $region23: #{_pca_project_pallas.1} parent=1 // pred_check_branch
      %48 = sbr.rel (%p46) target = $region25
    $region24: #{_pca_project_pallas.1} parent=1 // pred_region
      %49 = vst [vmem:[#allocation2] sm:$0xff] 0.0
    $region25: #{_pca_project_pallas.1} parent=1 // pred_fallthru
      _
    %v50 = vld [vmem:[#allocation2] sm:$0xff]
    %v51 = vld [vmem:[#allocation3] sm:$0xff]
    %v52 = vld [vmem:[#allocation6] sm:$0xff]
    %v53 = vld [vmem:[#allocation6 + $0x8] sm:$0xff]
    %v54 = vld [vmem:[#allocation6 + $0x10] sm:$0xff]
    %v55 = vld [vmem:[#allocation6 + $0x18] sm:$0xff]
    %vm56 = vcmask 261120
    %v58 = vsel %vm56, %v51, 0
    %60 = vmatpush.msra.mxu0 0.0
    %61 = vmatpush.msra.mxu0 0.0
    %62 = vmatpush.msra.mxu0 0.0
    %63 = vmatpush.msra.mxu0 0.0
    %64 = vmatpush.msra.mxu0 0.0
    %65 = vmatpush.msra.mxu0 0.0
    %66 = vmatpush.msra.mxu0 0.0
    %67 = vmatpush.msra.mxu0 0.0
    %68 = vmatpush.msra.mxu0 0.0
    %69 = vmatpush.msra.mxu0 0.0
    %70 = vmatpush.msra.mxu0 0.0
    %71 = vmatpush.msra.mxu0 0.0
    %72 = vmatpush.msra.mxu0 %v55
    %73 = vmatpush.msra.mxu0 %v54
    %74 = vmatpush.msra.mxu0 %v53
    %75 = vmatpush.msra.mxu0 %v52
    %76 = vmatmul.f32.gmra.mxu0 %v58
    %v77 = vpop.f32.mrf.mxu0
    %v78 = vadd.f32 0.0, %v77
    %79 = vdwg.mxu0
    %v80 = vadd.f32 %v50, %v78
    %81 = vst [vmem:[#allocation2] sm:$0xff] %v80
    // Predicated region
    $region26: #{_pca_project_pallas.1} parent=1 // pred_check
      %p82 = pneg %p45
    $region27: #{_pca_project_pallas.1} parent=1 // pred_check_branch
      %84 = sbr.rel (%p82) target = $region29
    $region28: #{_pca_project_pallas.1} parent=1 // pred_region
      %v85 = vld [vmem:[#allocation2] sm:$0xff]
      %v86 = vld [vmem:[%s2] sm:$0x1]
      %v88 = vperm.slane %v86, 0
      %v90 = vadd.f32 %v85, %v88
      %91 = vst [vmem:[#allocation8] sm:$0xff] %v90
    $region29: #{_pca_project_pallas.1} parent=1 // pred_fallthru
      _
    // Predicated region
    $region30: #{_pca_project_pallas.1} parent=1 // pred_check
      _
    $region31: #{_pca_project_pallas.1} parent=1 // pred_check_branch
      %93 = sbr.rel (0) target = $region33
    $region32: #{_pca_project_pallas.1} parent=1 // pred_region
      %95 = vsyncadd [#allocation5], 0
      %s97 = sshll.u32 [#allocation8], 4
      %s98 = int_to_ptr.vmem [resolvable:$true] %s97
      %s99 = sshll.u32 %s3, 4
      %s100 = int_to_ptr.hbm [resolvable:$true] %s99
      %102 = dma.vmem_to_hbm [thread:$0]  %s98, 128, %s100, [#allocation5]
    $region33: #{_pca_project_pallas.1} parent=1 // pred_fallthru
      _
    // Predicated region
    $region34: #{_pca_project_pallas.1} parent=1 // pred_check
      _
    $region35: #{_pca_project_pallas.1} parent=1 // pred_check_branch
      %104 = sbr.rel (0) target = $region37
    $region36: #{_pca_project_pallas.1} parent=1 // pred_region
      %106 = dma.done [#allocation5], 128
    $region37: #{_pca_project_pallas.1} parent=1 // pred_fallthru
      _
    %107 = vsyncpa [#allocation4], 1
    %108 = vsyncpa [#allocation7], 1
    %109 = vsyncpa [#allocation5], 1

</llo_original>
